<compile_context>
chip_gen: v7x
topology: tpu7x:2x2x1
jax: 0.10.0
libtpu: 0.0.40
codegen_flags: <defaults>
</compile_context>

<pallas_src>
import functools

import jax
import jax.numpy as jnp
from jax.experimental import pallas as pl
from jax.experimental.pallas import tpu as pltpu


# ----------------------------- Pallas kernel --------------------------------
def _decoder_kernel(xenc_ref, woutT_ref, bout_ref, g0_ref,
                    whhT_ref, wrec_ref, brec_ref,
                    wh2oT_ref, bh2o_ref,
                    out_ref,
                    hist_sc,
                    *, hidden_dim, num_steps, batch):
    H, T, B = hidden_dim, num_steps, batch

    def lstm_cell(gates, c_prev):
        # gate layout (after wrapper permutation): (i, f, o, g)
        sig = jax.nn.sigmoid(gates[:, :3 * H])        # one contiguous sigmoid slab
        g_g = jnp.tanh(gates[:, 3 * H:])              # one contiguous tanh slab
        i_g = sig[:, 0 * H:1 * H]
        f_g = sig[:, 1 * H:2 * H]
        o_g = sig[:, 2 * H:3 * H]
        c_new = f_g * c_prev + i_g * g_g
        h_new = o_g * jnp.tanh(c_new)
        return h_new, c_new

    # ---- initial state: h0 = c0 = Linear(images_encoding) ------------------
    h0 = (jnp.dot(xenc_ref[...], woutT_ref[...],
                  preferred_element_type=jnp.float32) + bout_ref[...])

    # ---- step 0: x_0 = <SOS>; its Wih^T contribution is the constant g0 ----
    gates = g0_ref[...] + jnp.dot(h0, whhT_ref[...],
                                  preferred_element_type=jnp.float32)
    h, c = lstm_cell(gates, h0)                       # c0 = h0
    hist_sc[0:B, :] = h

    # ---- steps 1..T-1: fused recurrence (x_t folded into W_rec / b_rec) ----
    # T is a small static trip count -> fully unrolled, h/c live in vregs.
    for t in range(1, T):
        gates = (jnp.dot(h, wrec_ref[...], preferred_element_type=jnp.float32)
                 + brec_ref[...])
        h, c = lstm_cell(gates, c)
        hist_sc[t * B:(t + 1) * B, :] = h

    # ---- batched hidden2out + log_softmax over all T*B rows, one bulk store -
    hist = hist_sc[...]                                              # (T*B, H)
    y = (jnp.dot(hist, wh2oT_ref[...], preferred_element_type=jnp.float32)
         + bh2o_ref[...])                                            # (T*B, E)
    m = jnp.max(y, axis=-1, keepdims=True)
    z = y - m
    lse = jnp.log(jnp.sum(jnp.exp(z), axis=-1, keepdims=True))
    out_ref[...] = z - lse


# ------------------------------ wrapper --------------------------------------
def decoder_forward(images_encoding, lengths, params):
    """Pallas equivalent of Decoder.forward. Returns (T, B, embedding_dim)."""
    T = int(max(lengths))
    B, _ = images_encoding.shape
    H = params["whhT"].shape[0]
    E = params["wihT"].shape[0]
    hi = jax.lax.Precision.HIGHEST

    def perm(w):  # PyTorch gate order (i, f, g, o) -> (i, f, o, g)
        return jnp.concatenate(
            [w[..., 0 * H:1 * H], w[..., 1 * H:2 * H],
             w[..., 3 * H:4 * H], w[..., 2 * H:3 * H]], axis=-1)

    wih_p = perm(params["wihT"])                        # (E, 4H)
    whh_p = perm(params["whhT"])                        # (H, 4H)
    bg_p = perm(params["bg"])                           # (1, 4H)

    # Algebraic fusion of the recurrence (full precision, done once).
    w_rec = whh_p + jnp.dot(params["wh2oT"], wih_p, precision=hi)   # (H, 4H)
    b_rec = bg_p + jnp.dot(params["bh2o"], wih_p, precision=hi)     # (1, 4H)

    # <SOS> embedding contribution to the first gate pre-activation.
    sos = params["emb_table"][params["sos_id"]][None, :]            # (1, E)
    g0 = jnp.dot(sos, wih_p, precision=hi) + bg_p                   # (1, 4H)

    inputs = (
        images_encoding.astype(jnp.float32),            # (B, ENC)
        params["woutT"],                                # (ENC, H)
        params["bout"],                                 # (1, H)
        g0.astype(jnp.float32),                         # (1, 4H)
        whh_p,                                          # (H, 4H)
        w_rec,                                          # (H, 4H)
        b_rec,                                          # (1, 4H)
        params["wh2oT"],                                # (H, E)
        params["bh2o"],                                 # (1, E)
    )
    full = lambda i: (0, 0)                             # everything is one full 2-D block
    in_specs = [pl.BlockSpec(a.shape, full) for a in inputs]

    kernel = functools.partial(_decoder_kernel, hidden_dim=H,
                               num_steps=T, batch=B)

    out_flat = pl.pallas_call(
        kernel,
        out_shape=jax.ShapeDtypeStruct((T * B, E), jnp.float32),
        grid_spec=pltpu.PrefetchScalarGridSpec(
            num_scalar_prefetch=0,
            grid=(1,),                                  # single grid step; loop is in-kernel
            in_specs=in_specs,
            out_specs=pl.BlockSpec((T * B, E), full),
            scratch_shapes=[
                pltpu.VMEM((T * B, H), jnp.float32),    # hidden-state history
            ],
        ),
        compiler_params=pltpu.CompilerParams(
            dimension_semantics=("arbitrary",),
        ),
    )(*inputs)
    return out_flat.reshape(T, B, E)


# --------------------------- pure-JAX reference -------------------------------
def decoder_reference(images_encoding, lengths, params):
    T = int(max(lengths))
    B = images_encoding.shape[0]
    E = params["wihT"].shape[0]
    h = images_encoding @ params["woutT"] + params["bout"]
    c = h
    x = jnp.broadcast_to(params["emb_table"][params["sos_id"]][None, :], (B, E))
    outs = []
    for _ in range(T):
        gates = x @ params["wihT"] + h @ params["whhT"] + params["bg"]
        i, f, g, o = jnp.split(gates, 4, axis=-1)
        i, f, g, o = jax.nn.sigmoid(i), jax.nn.sigmoid(f), jnp.tanh(g), jax.nn.sigmoid(o)
        c = f * c + i * g
        h = o * jnp.tanh(c)
        y = h @ params["wh2oT"] + params["bh2o"]
        outs.append(y)
        x = y
    out = jnp.stack(outs, axis=0)                       # (T, B, E)
    return jax.nn.log_softmax(out, axis=-1)


# ------------------------------ parameters ------------------------------------
def init_params(key, encoding_dim, embedding_dim, hidden_dim, vocab_size):
    ks = jax.random.split(key, 8)
    s = 0.1
    return {
        # nn.Linear(encoding_dim, hidden_dim)  (stored transposed for x @ W^T)
        "woutT": s * jax.random.normal(ks[0], (encoding_dim, hidden_dim), jnp.float32),
        "bout":  s * jax.random.normal(ks[1], (1, hidden_dim), jnp.float32),
        # nn.LSTM(embedding_dim, hidden_dim): W_ih (4H,E), W_hh (4H,H) -> transposed
        "wihT":  s * jax.random.normal(ks[2], (embedding_dim, 4 * hidden_dim), jnp.float32),
        "whhT":  s * jax.random.normal(ks[3], (hidden_dim, 4 * hidden_dim), jnp.float32),
        "bg":    s * jax.random.normal(ks[4], (1, 4 * hidden_dim), jnp.float32),  # b_ih + b_hh
        # nn.Linear(hidden_dim, embedding_dim)
        "wh2oT": s * jax.random.normal(ks[5], (hidden_dim, embedding_dim), jnp.float32),
        "bh2o":  s * jax.random.normal(ks[6], (1, embedding_dim), jnp.float32),
        # Embedding table (for Embedding.get of the <SOS> token)
        "emb_table": s * jax.random.normal(ks[7], (vocab_size, embedding_dim), jnp.float32),
        "sos_id": 1,
    }


# ----------------------------------- main --------------------------------------
if __name__ == "__main__":
    B, ENC, E, H, V = 8, 16, 32, 32, 16
    lengths = [3, 6, 4, 6, 2, 5, 6, 1]          # max(lengths) = 6 unroll steps

    key = jax.random.PRNGKey(0)
    k_x, k_p = jax.random.split(key)
    images_encoding = jax.random.normal(k_x, (B, ENC), jnp.float32)
    params = init_params(k_p, ENC, E, H, V)

    out = decoder_forward(images_encoding, lengths, params)
    out = jax.block_until_ready(out)

    ref = decoder_reference(images_encoding, lengths, params)
    assert out.shape == (max(lengths), B, E), out.shape
    assert jnp.allclose(out, ref, atol=5e-4, rtol=5e-4), float(jnp.max(jnp.abs(out - ref)))

    print("KERNEL_OK")
</pallas_src>

<mosaic_0001>
module attributes {stable_mosaic.version = 11 : i64} {
  func.func @_decoder_kernel(%arg0: i32, %arg1: memref<8x16xf32, #tpu.memory_space<vmem>>, %arg2: memref<16x32xf32, #tpu.memory_space<vmem>>, %arg3: memref<1x32xf32, #tpu.memory_space<vmem>>, %arg4: memref<1x128xf32, #tpu.memory_space<vmem>>, %arg5: memref<32x128xf32, #tpu.memory_space<vmem>>, %arg6: memref<32x128xf32, #tpu.memory_space<vmem>>, %arg7: memref<1x128xf32, #tpu.memory_space<vmem>>, %arg8: memref<32x32xf32, #tpu.memory_space<vmem>>, %arg9: memref<1x32xf32, #tpu.memory_space<vmem>>, %arg10: memref<48x32xf32, #tpu.memory_space<vmem>>, %arg11: memref<48x32xf32, #tpu.memory_space<vmem>>) attributes {dimension_semantics = [#tpu.dimension_semantics<arbitrary>], iteration_bounds = array<i64: 1>, scalar_prefetch = 0 : i64, scratch_operands = 1 : i64, tpu.core_type = #tpu.core_type<tc>, window_params = [{pipeline_mode = #tpu.pipeline_mode<synchronous>, transform_indices = @transform_0, window_bounds = array<i64: 8, 16>}, {pipeline_mode = #tpu.pipeline_mode<synchronous>, transform_indices = @transform_1, window_bounds = array<i64: 16, 32>}, {pipeline_mode = #tpu.pipeline_mode<synchronous>, transform_indices = @transform_2, window_bounds = array<i64: 1, 32>}, {pipeline_mode = #tpu.pipeline_mode<synchronous>, transform_indices = @transform_3, window_bounds = array<i64: 1, 128>}, {pipeline_mode = #tpu.pipeline_mode<synchronous>, transform_indices = @transform_4, window_bounds = array<i64: 32, 128>}, {pipeline_mode = #tpu.pipeline_mode<synchronous>, transform_indices = @transform_5, window_bounds = array<i64: 32, 128>}, {pipeline_mode = #tpu.pipeline_mode<synchronous>, transform_indices = @transform_6, window_bounds = array<i64: 1, 128>}, {pipeline_mode = #tpu.pipeline_mode<synchronous>, transform_indices = @transform_7, window_bounds = array<i64: 32, 32>}, {pipeline_mode = #tpu.pipeline_mode<synchronous>, transform_indices = @transform_8, window_bounds = array<i64: 1, 32>}, {pipeline_mode = #tpu.pipeline_mode<synchronous>, transform_indices = @transform_9, window_bounds = array<i64: 48, 32>}]} {
    %c0 = arith.constant 0 : index
    %c0_0 = arith.constant 0 : index
    %0 = vector.load %arg1[%c0, %c0_0] : memref<8x16xf32, #tpu.memory_space<vmem>>, vector<8x16xf32>
    %c0_1 = arith.constant 0 : index
    %c0_2 = arith.constant 0 : index
    %1 = vector.load %arg2[%c0_1, %c0_2] : memref<16x32xf32, #tpu.memory_space<vmem>>, vector<16x32xf32>
    %cst = arith.constant dense<0.000000e+00> : vector<8x32xf32>
    %2 = tpu.matmul %0, %1, %cst {dimension_numbers = #tpu.dot_dimension_numbers<[1], [0], [0], [1], [0, 0, 1, 1], [], []>} : vector<8x16xf32>, vector<16x32xf32>, vector<8x32xf32> -> vector<8x32xf32>
    %c0_3 = arith.constant 0 : index
    %c0_4 = arith.constant 0 : index
    %3 = vector.load %arg3[%c0_3, %c0_4] : memref<1x32xf32, #tpu.memory_space<vmem>>, vector<1x32xf32>
    %4 = vector.broadcast %3 : vector<1x32xf32> to vector<8x32xf32>
    %5 = arith.addf %2, %4 : vector<8x32xf32>
    %c0_5 = arith.constant 0 : index
    %c0_6 = arith.constant 0 : index
    %6 = vector.load %arg4[%c0_5, %c0_6] : memref<1x128xf32, #tpu.memory_space<vmem>>, vector<1x128xf32>
    %c0_7 = arith.constant 0 : index
    %c0_8 = arith.constant 0 : index
    %7 = vector.load %arg5[%c0_7, %c0_8] : memref<32x128xf32, #tpu.memory_space<vmem>>, vector<32x128xf32>
    %cst_9 = arith.constant dense<0.000000e+00> : vector<8x128xf32>
    %8 = tpu.matmul %5, %7, %cst_9 {dimension_numbers = #tpu.dot_dimension_numbers<[1], [0], [0], [1], [0, 0, 1, 1], [], []>} : vector<8x32xf32>, vector<32x128xf32>, vector<8x128xf32> -> vector<8x128xf32>
    %9 = vector.broadcast %6 : vector<1x128xf32> to vector<8x128xf32>
    %10 = arith.addf %9, %8 : vector<8x128xf32>
    %11 = vector.extract_strided_slice %10 {offsets = [0, 0], sizes = [8, 96], strides = [1, 1]} : vector<8x128xf32> to vector<8x96xf32>
    %12 = arith.negf %11 : vector<8x96xf32>
    %13 = math.exp %12 : vector<8x96xf32>
    %cst_10 = arith.constant 1.000000e+00 : f32
    %14 = vector.broadcast %cst_10 : f32 to vector<8x96xf32>
    %15 = arith.addf %14, %13 : vector<8x96xf32>
    %16 = arith.divf %14, %15 : vector<8x96xf32>
    %17 = vector.extract_strided_slice %10 {offsets = [0, 96], sizes = [8, 32], strides = [1, 1]} : vector<8x128xf32> to vector<8x32xf32>
    %18 = math.tanh %17 : vector<8x32xf32>
    %19 = vector.extract_strided_slice %16 {offsets = [0, 0], sizes = [8, 32], strides = [1, 1]} : vector<8x96xf32> to vector<8x32xf32>
    %20 = vector.extract_strided_slice %16 {offsets = [0, 32], sizes = [8, 32], strides = [1, 1]} : vector<8x96xf32> to vector<8x32xf32>
    %21 = vector.extract_strided_slice %16 {offsets = [0, 64], sizes = [8, 32], strides = [1, 1]} : vector<8x96xf32> to vector<8x32xf32>
    %22 = arith.mulf %20, %5 : vector<8x32xf32>
    %23 = arith.mulf %19, %18 : vector<8x32xf32>
    %24 = arith.addf %22, %23 : vector<8x32xf32>
    %25 = math.tanh %24 : vector<8x32xf32>
    %26 = arith.mulf %21, %25 : vector<8x32xf32>
    %c0_11 = arith.constant 0 : index
    %c0_12 = arith.constant 0 : index
    %27 = vector.load %arg11[%c0_11, %c0_12] : memref<48x32xf32, #tpu.memory_space<vmem>>, vector<8x32xf32>
    tpu.vector_store %arg11[%c0_11, %c0_12], %26 {strides = array<i32>} : memref<48x32xf32, #tpu.memory_space<vmem>>, vector<8x32xf32>,
    %c0_13 = arith.constant 0 : index
    %c0_14 = arith.constant 0 : index
    %28 = vector.load %arg6[%c0_13, %c0_14] : memref<32x128xf32, #tpu.memory_space<vmem>>, vector<32x128xf32>
    %cst_15 = arith.constant dense<0.000000e+00> : vector<8x128xf32>
    %29 = tpu.matmul %26, %28, %cst_15 {dimension_numbers = #tpu.dot_dimension_numbers<[1], [0], [0], [1], [0, 0, 1, 1], [], []>} : vector<8x32xf32>, vector<32x128xf32>, vector<8x128xf32> -> vector<8x128xf32>
    %c0_16 = arith.constant 0 : index
    %c0_17 = arith.constant 0 : index
    %30 = vector.load %arg7[%c0_16, %c0_17] : memref<1x128xf32, #tpu.memory_space<vmem>>, vector<1x128xf32>
    %31 = vector.broadcast %30 : vector<1x128xf32> to vector<8x128xf32>
    %32 = arith.addf %29, %31 : vector<8x128xf32>
    %33 = vector.extract_strided_slice %32 {offsets = [0, 0], sizes = [8, 96], strides = [1, 1]} : vector<8x128xf32> to vector<8x96xf32>
    %34 = arith.negf %33 : vector<8x96xf32>
    %35 = math.exp %34 : vector<8x96xf32>
    %cst_18 = arith.constant 1.000000e+00 : f32
    %36 = vector.broadcast %cst_18 : f32 to vector<8x96xf32>
    %37 = arith.addf %36, %35 : vector<8x96xf32>
    %38 = arith.divf %36, %37 : vector<8x96xf32>
    %39 = vector.extract_strided_slice %32 {offsets = [0, 96], sizes = [8, 32], strides = [1, 1]} : vector<8x128xf32> to vector<8x32xf32>
    %40 = math.tanh %39 : vector<8x32xf32>
    %41 = vector.extract_strided_slice %38 {offsets = [0, 0], sizes = [8, 32], strides = [1, 1]} : vector<8x96xf32> to vector<8x32xf32>
    %42 = vector.extract_strided_slice %38 {offsets = [0, 32], sizes = [8, 32], strides = [1, 1]} : vector<8x96xf32> to vector<8x32xf32>
    %43 = vector.extract_strided_slice %38 {offsets = [0, 64], sizes = [8, 32], strides = [1, 1]} : vector<8x96xf32> to vector<8x32xf32>
    %44 = arith.mulf %42, %24 : vector<8x32xf32>
    %45 = arith.mulf %41, %40 : vector<8x32xf32>
    %46 = arith.addf %44, %45 : vector<8x32xf32>
    %47 = math.tanh %46 : vector<8x32xf32>
    %48 = arith.mulf %43, %47 : vector<8x32xf32>
    %c8 = arith.constant 8 : index
    %c0_19 = arith.constant 0 : index
    %49 = vector.load %arg11[%c8, %c0_19] : memref<48x32xf32, #tpu.memory_space<vmem>>, vector<8x32xf32>
    tpu.vector_store %arg11[%c8, %c0_19], %48 {strides = array<i32>} : memref<48x32xf32, #tpu.memory_space<vmem>>, vector<8x32xf32>,
    %c0_20 = arith.constant 0 : index
    %c0_21 = arith.constant 0 : index
    %50 = vector.load %arg6[%c0_20, %c0_21] : memref<32x128xf32, #tpu.memory_space<vmem>>, vector<32x128xf32>
    %cst_22 = arith.constant dense<0.000000e+00> : vector<8x128xf32>
    %51 = tpu.matmul %48, %50, %cst_22 {dimension_numbers = #tpu.dot_dimension_numbers<[1], [0], [0], [1], [0, 0, 1, 1], [], []>} : vector<8x32xf32>, vector<32x128xf32>, vector<8x128xf32> -> vector<8x128xf32>
    %c0_23 = arith.constant 0 : index
    %c0_24 = arith.constant 0 : index
    %52 = vector.load %arg7[%c0_23, %c0_24] : memref<1x128xf32, #tpu.memory_space<vmem>>, vector<1x128xf32>
    %53 = vector.broadcast %52 : vector<1x128xf32> to vector<8x128xf32>
    %54 = arith.addf %51, %53 : vector<8x128xf32>
    %55 = vector.extract_strided_slice %54 {offsets = [0, 0], sizes = [8, 96], strides = [1, 1]} : vector<8x128xf32> to vector<8x96xf32>
    %56 = arith.negf %55 : vector<8x96xf32>
    %57 = math.exp %56 : vector<8x96xf32>
    %cst_25 = arith.constant 1.000000e+00 : f32
    %58 = vector.broadcast %cst_25 : f32 to vector<8x96xf32>
    %59 = arith.addf %58, %57 : vector<8x96xf32>
    %60 = arith.divf %58, %59 : vector<8x96xf32>
    %61 = vector.extract_strided_slice %54 {offsets = [0, 96], sizes = [8, 32], strides = [1, 1]} : vector<8x128xf32> to vector<8x32xf32>
    %62 = math.tanh %61 : vector<8x32xf32>
    %63 = vector.extract_strided_slice %60 {offsets = [0, 0], sizes = [8, 32], strides = [1, 1]} : vector<8x96xf32> to vector<8x32xf32>
    %64 = vector.extract_strided_slice %60 {offsets = [0, 32], sizes = [8, 32], strides = [1, 1]} : vector<8x96xf32> to vector<8x32xf32>
    %65 = vector.extract_strided_slice %60 {offsets = [0, 64], sizes = [8, 32], strides = [1, 1]} : vector<8x96xf32> to vector<8x32xf32>
    %66 = arith.mulf %64, %46 : vector<8x32xf32>
    %67 = arith.mulf %63, %62 : vector<8x32xf32>
    %68 = arith.addf %66, %67 : vector<8x32xf32>
    %69 = math.tanh %68 : vector<8x32xf32>
    %70 = arith.mulf %65, %69 : vector<8x32xf32>
    %c16 = arith.constant 16 : index
    %c0_26 = arith.constant 0 : index
    %71 = vector.load %arg11[%c16, %c0_26] : memref<48x32xf32, #tpu.memory_space<vmem>>, vector<8x32xf32>
    tpu.vector_store %arg11[%c16, %c0_26], %70 {strides = array<i32>} : memref<48x32xf32, #tpu.memory_space<vmem>>, vector<8x32xf32>,
    %c0_27 = arith.constant 0 : index
    %c0_28 = arith.constant 0 : index
    %72 = vector.load %arg6[%c0_27, %c0_28] : memref<32x128xf32, #tpu.memory_space<vmem>>, vector<32x128xf32>
    %cst_29 = arith.constant dense<0.000000e+00> : vector<8x128xf32>
    %73 = tpu.matmul %70, %72, %cst_29 {dimension_numbers = #tpu.dot_dimension_numbers<[1], [0], [0], [1], [0, 0, 1, 1], [], []>} : vector<8x32xf32>, vector<32x128xf32>, vector<8x128xf32> -> vector<8x128xf32>
    %c0_30 = arith.constant 0 : index
    %c0_31 = arith.constant 0 : index
    %74 = vector.load %arg7[%c0_30, %c0_31] : memref<1x128xf32, #tpu.memory_space<vmem>>, vector<1x128xf32>
    %75 = vector.broadcast %74 : vector<1x128xf32> to vector<8x128xf32>
    %76 = arith.addf %73, %75 : vector<8x128xf32>
    %77 = vector.extract_strided_slice %76 {offsets = [0, 0], sizes = [8, 96], strides = [1, 1]} : vector<8x128xf32> to vector<8x96xf32>
    %78 = arith.negf %77 : vector<8x96xf32>
    %79 = math.exp %78 : vector<8x96xf32>
    %cst_32 = arith.constant 1.000000e+00 : f32
    %80 = vector.broadcast %cst_32 : f32 to vector<8x96xf32>
    %81 = arith.addf %80, %79 : vector<8x96xf32>
    %82 = arith.divf %80, %81 : vector<8x96xf32>
    %83 = vector.extract_strided_slice %76 {offsets = [0, 96], sizes = [8, 32], strides = [1, 1]} : vector<8x128xf32> to vector<8x32xf32>
    %84 = math.tanh %83 : vector<8x32xf32>
    %85 = vector.extract_strided_slice %82 {offsets = [0, 0], sizes = [8, 32], strides = [1, 1]} : vector<8x96xf32> to vector<8x32xf32>
    %86 = vector.extract_strided_slice %82 {offsets = [0, 32], sizes = [8, 32], strides = [1, 1]} : vector<8x96xf32> to vector<8x32xf32>
    %87 = vector.extract_strided_slice %82 {offsets = [0, 64], sizes = [8, 32], strides = [1, 1]} : vector<8x96xf32> to vector<8x32xf32>
    %88 = arith.mulf %86, %68 : vector<8x32xf32>
    %89 = arith.mulf %85, %84 : vector<8x32xf32>
    %90 = arith.addf %88, %89 : vector<8x32xf32>
    %91 = math.tanh %90 : vector<8x32xf32>
    %92 = arith.mulf %87, %91 : vector<8x32xf32>
    %c24 = arith.constant 24 : index
    %c0_33 = arith.constant 0 : index
    %93 = vector.load %arg11[%c24, %c0_33] : memref<48x32xf32, #tpu.memory_space<vmem>>, vector<8x32xf32>
    tpu.vector_store %arg11[%c24, %c0_33], %92 {strides = array<i32>} : memref<48x32xf32, #tpu.memory_space<vmem>>, vector<8x32xf32>,
    %c0_34 = arith.constant 0 : index
    %c0_35 = arith.constant 0 : index
    %94 = vector.load %arg6[%c0_34, %c0_35] : memref<32x128xf32, #tpu.memory_space<vmem>>, vector<32x128xf32>
    %cst_36 = arith.constant dense<0.000000e+00> : vector<8x128xf32>
    %95 = tpu.matmul %92, %94, %cst_36 {dimension_numbers = #tpu.dot_dimension_numbers<[1], [0], [0], [1], [0, 0, 1, 1], [], []>} : vector<8x32xf32>, vector<32x128xf32>, vector<8x128xf32> -> vector<8x128xf32>
    %c0_37 = arith.constant 0 : index
    %c0_38 = arith.constant 0 : index
    %96 = vector.load %arg7[%c0_37, %c0_38] : memref<1x128xf32, #tpu.memory_space<vmem>>, vector<1x128xf32>
    %97 = vector.broadcast %96 : vector<1x128xf32> to vector<8x128xf32>
    %98 = arith.addf %95, %97 : vector<8x128xf32>
    %99 = vector.extract_strided_slice %98 {offsets = [0, 0], sizes = [8, 96], strides = [1, 1]} : vector<8x128xf32> to vector<8x96xf32>
    %100 = arith.negf %99 : vector<8x96xf32>
    %101 = math.exp %100 : vector<8x96xf32>
    %cst_39 = arith.constant 1.000000e+00 : f32
    %102 = vector.broadcast %cst_39 : f32 to vector<8x96xf32>
    %103 = arith.addf %102, %101 : vector<8x96xf32>
    %104 = arith.divf %102, %103 : vector<8x96xf32>
    %105 = vector.extract_strided_slice %98 {offsets = [0, 96], sizes = [8, 32], strides = [1, 1]} : vector<8x128xf32> to vector<8x32xf32>
    %106 = math.tanh %105 : vector<8x32xf32>
    %107 = vector.extract_strided_slice %104 {offsets = [0, 0], sizes = [8, 32], strides = [1, 1]} : vector<8x96xf32> to vector<8x32xf32>
    %108 = vector.extract_strided_slice %104 {offsets = [0, 32], sizes = [8, 32], strides = [1, 1]} : vector<8x96xf32> to vector<8x32xf32>
    %109 = vector.extract_strided_slice %104 {offsets = [0, 64], sizes = [8, 32], strides = [1, 1]} : vector<8x96xf32> to vector<8x32xf32>
    %110 = arith.mulf %108, %90 : vector<8x32xf32>
    %111 = arith.mulf %107, %106 : vector<8x32xf32>
    %112 = arith.addf %110, %111 : vector<8x32xf32>
    %113 = math.tanh %112 : vector<8x32xf32>
    %114 = arith.mulf %109, %113 : vector<8x32xf32>
    %c32 = arith.constant 32 : index
    %c0_40 = arith.constant 0 : index
    %115 = vector.load %arg11[%c32, %c0_40] : memref<48x32xf32, #tpu.memory_space<vmem>>, vector<8x32xf32>
    tpu.vector_store %arg11[%c32, %c0_40], %114 {strides = array<i32>} : memref<48x32xf32, #tpu.memory_space<vmem>>, vector<8x32xf32>,
    %c0_41 = arith.constant 0 : index
    %c0_42 = arith.constant 0 : index
    %116 = vector.load %arg6[%c0_41, %c0_42] : memref<32x128xf32, #tpu.memory_space<vmem>>, vector<32x128xf32>
    %cst_43 = arith.constant dense<0.000000e+00> : vector<8x128xf32>
    %117 = tpu.matmul %114, %116, %cst_43 {dimension_numbers = #tpu.dot_dimension_numbers<[1], [0], [0], [1], [0, 0, 1, 1], [], []>} : vector<8x32xf32>, vector<32x128xf32>, vector<8x128xf32> -> vector<8x128xf32>
    %c0_44 = arith.constant 0 : index
    %c0_45 = arith.constant 0 : index
    %118 = vector.load %arg7[%c0_44, %c0_45] : memref<1x128xf32, #tpu.memory_space<vmem>>, vector<1x128xf32>
    %119 = vector.broadcast %118 : vector<1x128xf32> to vector<8x128xf32>
    %120 = arith.addf %117, %119 : vector<8x128xf32>
    %121 = vector.extract_strided_slice %120 {offsets = [0, 0], sizes = [8, 96], strides = [1, 1]} : vector<8x128xf32> to vector<8x96xf32>
    %122 = arith.negf %121 : vector<8x96xf32>
    %123 = math.exp %122 : vector<8x96xf32>
    %cst_46 = arith.constant 1.000000e+00 : f32
    %124 = vector.broadcast %cst_46 : f32 to vector<8x96xf32>
    %125 = arith.addf %124, %123 : vector<8x96xf32>
    %126 = arith.divf %124, %125 : vector<8x96xf32>
    %127 = vector.extract_strided_slice %120 {offsets = [0, 96], sizes = [8, 32], strides = [1, 1]} : vector<8x128xf32> to vector<8x32xf32>
    %128 = math.tanh %127 : vector<8x32xf32>
    %129 = vector.extract_strided_slice %126 {offsets = [0, 0], sizes = [8, 32], strides = [1, 1]} : vector<8x96xf32> to vector<8x32xf32>
    %130 = vector.extract_strided_slice %126 {offsets = [0, 32], sizes = [8, 32], strides = [1, 1]} : vector<8x96xf32> to vector<8x32xf32>
    %131 = vector.extract_strided_slice %126 {offsets = [0, 64], sizes = [8, 32], strides = [1, 1]} : vector<8x96xf32> to vector<8x32xf32>
    %132 = arith.mulf %130, %112 : vector<8x32xf32>
    %133 = arith.mulf %129, %128 : vector<8x32xf32>
    %134 = arith.addf %132, %133 : vector<8x32xf32>
    %135 = math.tanh %134 : vector<8x32xf32>
    %136 = arith.mulf %131, %135 : vector<8x32xf32>
    %c40 = arith.constant 40 : index
    %c0_47 = arith.constant 0 : index
    %137 = vector.load %arg11[%c40, %c0_47] : memref<48x32xf32, #tpu.memory_space<vmem>>, vector<8x32xf32>
    tpu.vector_store %arg11[%c40, %c0_47], %136 {strides = array<i32>} : memref<48x32xf32, #tpu.memory_space<vmem>>, vector<8x32xf32>,
    %c0_48 = arith.constant 0 : index
    %c0_49 = arith.constant 0 : index
    %138 = vector.load %arg11[%c0_48, %c0_49] : memref<48x32xf32, #tpu.memory_space<vmem>>, vector<48x32xf32>
    %c0_50 = arith.constant 0 : index
    %c0_51 = arith.constant 0 : index
    %139 = vector.load %arg8[%c0_50, %c0_51] : memref<32x32xf32, #tpu.memory_space<vmem>>, vector<32x32xf32>
    %cst_52 = arith.constant dense<0.000000e+00> : vector<48x32xf32>
    %140 = tpu.matmul %138, %139, %cst_52 {dimension_numbers = #tpu.dot_dimension_numbers<[1], [0], [0], [1], [0, 0, 1, 1], [], []>} : vector<48x32xf32>, vector<32x32xf32>, vector<48x32xf32> -> vector<48x32xf32>
    %c0_53 = arith.constant 0 : index
    %c0_54 = arith.constant 0 : index
    %141 = vector.load %arg9[%c0_53, %c0_54] : memref<1x32xf32, #tpu.memory_space<vmem>>, vector<1x32xf32>
    %142 = vector.broadcast %141 : vector<1x32xf32> to vector<48x32xf32>
    %143 = arith.addf %140, %142 : vector<48x32xf32>
    %cst_55 = arith.constant dense<0xFF800000> : vector<48xf32>
    %144 = vector.multi_reduction <maximumf>, %143, %cst_55 [1] : vector<48x32xf32> to vector<48xf32>
    %145 = vector.shape_cast %144 : vector<48xf32> to vector<48x1xf32>
    %146 = vector.broadcast %145 : vector<48x1xf32> to vector<48x32xf32>
    %147 = arith.subf %143, %146 : vector<48x32xf32>
    %148 = math.exp %147 : vector<48x32xf32>
    %cst_56 = arith.constant dense<0.000000e+00> : vector<48xf32>
    %149 = vector.multi_reduction <add>, %148, %cst_56 [1] : vector<48x32xf32> to vector<48xf32>
    %150 = vector.shape_cast %149 : vector<48xf32> to vector<48x1xf32>
    %151 = math.log %150 : vector<48x1xf32>
    %152 = vector.broadcast %151 : vector<48x1xf32> to vector<48x32xf32>
    %153 = arith.subf %147, %152 : vector<48x32xf32>
    %c0_57 = arith.constant 0 : index
    %c0_58 = arith.constant 0 : index
    %154 = vector.load %arg10[%c0_57, %c0_58] : memref<48x32xf32, #tpu.memory_space<vmem>>, vector<48x32xf32>
    tpu.vector_store %arg10[%c0_57, %c0_58], %153 {strides = array<i32>} : memref<48x32xf32, #tpu.memory_space<vmem>>, vector<48x32xf32>,
    return
  }
  func.func @transform_0(%arg0: i32) -> (i32, i32) {
    %c0_i32 = arith.constant 0 : i32
    %c0_i32_0 = arith.constant 0 : i32
    %c0_i32_1 = arith.constant 0 : i32
    return %c0_i32, %c0_i32_0 : i32, i32
  }
  func.func @transform_1(%arg0: i32) -> (i32, i32) {
    %c0_i32 = arith.constant 0 : i32
    %c0_i32_0 = arith.constant 0 : i32
    %c0_i32_1 = arith.constant 0 : i32
    return %c0_i32, %c0_i32_0 : i32, i32
  }
  func.func @transform_2(%arg0: i32) -> (i32, i32) {
    %c0_i32 = arith.constant 0 : i32
    %c0_i32_0 = arith.constant 0 : i32
    %c0_i32_1 = arith.constant 0 : i32
    return %c0_i32, %c0_i32_0 : i32, i32
  }
  func.func @transform_3(%arg0: i32) -> (i32, i32) {
    %c0_i32 = arith.constant 0 : i32
    %c0_i32_0 = arith.constant 0 : i32
    %c0_i32_1 = arith.constant 0 : i32
    return %c0_i32, %c0_i32_0 : i32, i32
  }
  func.func @transform_4(%arg0: i32) -> (i32, i32) {
    %c0_i32 = arith.constant 0 : i32
    %c0_i32_0 = arith.constant 0 : i32
    %c0_i32_1 = arith.constant 0 : i32
    return %c0_i32, %c0_i32_0 : i32, i32
  }
  func.func @transform_5(%arg0: i32) -> (i32, i32) {
    %c0_i32 = arith.constant 0 : i32
    %c0_i32_0 = arith.constant 0 : i32
    %c0_i32_1 = arith.constant 0 : i32
    return %c0_i32, %c0_i32_0 : i32, i32
  }
  func.func @transform_6(%arg0: i32) -> (i32, i32) {
    %c0_i32 = arith.constant 0 : i32
    %c0_i32_0 = arith.constant 0 : i32
    %c0_i32_1 = arith.constant 0 : i32
    return %c0_i32, %c0_i32_0 : i32, i32
  }
  func.func @transform_7(%arg0: i32) -> (i32, i32) {
    %c0_i32 = arith.constant 0 : i32
    %c0_i32_0 = arith.constant 0 : i32
    %c0_i32_1 = arith.constant 0 : i32
    return %c0_i32, %c0_i32_0 : i32, i32
  }
  func.func @transform_8(%arg0: i32) -> (i32, i32) {
    %c0_i32 = arith.constant 0 : i32
    %c0_i32_0 = arith.constant 0 : i32
    %c0_i32_1 = arith.constant 0 : i32
    return %c0_i32, %c0_i32_0 : i32, i32
  }
  func.func @transform_9(%arg0: i32) -> (i32, i32) {
    %c0_i32 = arith.constant 0 : i32
    %c0_i32_0 = arith.constant 0 : i32
    %c0_i32_1 = arith.constant 0 : i32
    return %c0_i32, %c0_i32_0 : i32, i32
  }
}

</mosaic_0001>

<llo_original>
// kernel: tpu_custom_call.1
$region0: #{tpu_custom_call.1}
  #allocation0 [shape = 'u32[]', space=smem, size = 0x4, offset = 0x4, fixed_abs, tag = 'smem constant byte address 0x4 - core index']
  #allocation1 [shape = 'u32[144,128]{1,0:T(1,128)}', space=vmem, size = 0x12000, scoped, tag = 'internal scratch']
  #allocation2 [shape = 'f32[48,32]{1,0:T(8,128)}', space=vmem, size = 0x6000, scoped, tag = 'scratch operand']
  %s0 = inlined_call_operand.hbm [shape: f32[8,16], index: 0, kind: input, shape index: {}]
  %s1 = inlined_call_operand.hbm [shape: f32[16,32], index: 1, kind: input, shape index: {}]
  %s2 = inlined_call_operand.vmem [shape: f32[1,32], index: 2, kind: input, shape index: {}]
  %s3 = inlined_call_operand.vmem [shape: f32[1,128], index: 3, kind: input, shape index: {}]
  %s4 = inlined_call_operand.hbm [shape: f32[32,128], index: 4, kind: input, shape index: {}]
  %s5 = inlined_call_operand.hbm [shape: f32[32,128], index: 5, kind: input, shape index: {}]
  %s6 = inlined_call_operand.vmem [shape: f32[1,128], index: 6, kind: input, shape index: {}]
  %s7 = inlined_call_operand.hbm [shape: f32[32,32], index: 7, kind: input, shape index: {}]
  %s8 = inlined_call_operand.vmem [shape: f32[1,32], index: 8, kind: input, shape index: {}]
  %s9 = inlined_call_operand.vmem [shape: f32[48,32], index: 9, kind: output, shape index: {}]
  %s10 = sld [smem:[#allocation0]]
  $region66: #{tpu_custom_call.1} parent=0
    _
  %s12 = ssub.s32 1, %s10
  %s13 = scalar_select 0, %s12, %s10
  $region1: #{tpu_custom_call.1} parent=0
    #allocation3 [shape = 'u8[4096]{0}', space=vmem, size = 0x1000, scoped, tag = 'input window, operand 0, single buffered']
    #allocation4 [shape = 's32[1]{0}', space=sflag, size = 0x4, scoped, tag = 'scoped memory for tpu_custom_call.1']
    #allocation5 [shape = 'u8[8192]{0}', space=vmem, size = 0x2000, scoped, tag = 'input window, operand 1, single buffered']
    #allocation6 [shape = 's32[1]{0}', space=sflag, size = 0x4, scoped, tag = 'scoped memory for tpu_custom_call.1']
    #allocation7 [shape = 'u8[16384]{0}', space=vmem, size = 0x4000, scoped, tag = 'input window, operand 4, single buffered']
    #allocation8 [shape = 'u8[16384]{0}', space=vmem, size = 0x4000, scoped, tag = 'input window, operand 5, single buffered']
    #allocation9 [shape = 's32[1]{0}', space=sflag, size = 0x4, scoped, tag = 'scoped memory for tpu_custom_call.1']
    #allocation10 [shape = 'u8[16384]{0}', space=vmem, size = 0x4000, scoped, tag = 'input window, operand 7, single buffered']
    %14 = vsyncpa [#allocation4], 0
    %15 = vsyncpa [#allocation6], 0
    %16 = vsyncpa [#allocation9], 0
    // Predicated region
    $region2: #{tpu_custom_call.1} parent=1 // pred_check
      _
    $region3: #{tpu_custom_call.1} parent=1 // pred_check_branch
      %18 = sbr.rel (0) target = $region5
    $region4: #{tpu_custom_call.1} parent=1 // pred_region
      %s20 = ssub.s32 128, 128
      %21 = vsyncadd [#allocation4], %s20
      %s23 = sshll.u32 [#allocation3], 4
      %s24 = int_to_ptr.vmem [resolvable:$true] %s23
      %26 = dma.hbm_to_vmem [thread:$0]  %s0, 128, %s24, [#allocation4]
    $region5: #{tpu_custom_call.1} parent=1 // pred_fallthru
      _
    // Predicated region
    $region6: #{tpu_custom_call.1} parent=1 // pred_check
      _
    $region7: #{tpu_custom_call.1} parent=1 // pred_check_branch
      %28 = sbr.rel (0) target = $region9
    $region8: #{tpu_custom_call.1} parent=1 // pred_region
      %s30 = ssub.s32 256, 256
      %31 = vsyncadd [#allocation6], %s30
      %s32 = sshll.u32 [#allocation5], 4
      %s33 = int_to_ptr.vmem [resolvable:$true] %s32
      %38 = dma.hbm_to_vmem [thread:$0]  %s1, 256, %s33, [#allocation6], 128, 128, 8
    $region9: #{tpu_custom_call.1} parent=1 // pred_fallthru
      _
    // Predicated region
    $region10: #{tpu_custom_call.1} parent=1 // pred_check
      _
    $region11: #{tpu_custom_call.1} parent=1 // pred_check_branch
      %40 = sbr.rel (0) target = $region13
    $region12: #{tpu_custom_call.1} parent=1 // pred_region
      _
    $region13: #{tpu_custom_call.1} parent=1 // pred_fallthru
      _
    // Predicated region
    $region14: #{tpu_custom_call.1} parent=1 // pred_check
      _
    $region15: #{tpu_custom_call.1} parent=1 // pred_check_branch
      %42 = sbr.rel (0) target = $region17
    $region16: #{tpu_custom_call.1} parent=1 // pred_region
      _
    $region17: #{tpu_custom_call.1} parent=1 // pred_fallthru
      _
    // Predicated region
    $region18: #{tpu_custom_call.1} parent=1 // pred_check
      _
    $region19: #{tpu_custom_call.1} parent=1 // pred_check_branch
      %44 = sbr.rel (0) target = $region21
    $region20: #{tpu_custom_call.1} parent=1 // pred_region
      %s46 = ssub.s32 512, 512
      %47 = vsyncadd [#allocation6], %s46
      %s48 = sshll.u32 [#allocation7], 4
      %s49 = int_to_ptr.vmem [resolvable:$true] %s48
      %54 = dma.hbm_to_vmem [thread:$0]  %s4, 512, %s49, [#allocation6], 128, 128, 8
    $region21: #{tpu_custom_call.1} parent=1 // pred_fallthru
      _
    // Predicated region
    $region22: #{tpu_custom_call.1} parent=1 // pred_check
      _
    $region23: #{tpu_custom_call.1} parent=1 // pred_check_branch
      %56 = sbr.rel (0) target = $region25
    $region24: #{tpu_custom_call.1} parent=1 // pred_region
      %s58 = ssub.s32 512, 512
      %59 = vsyncadd [#allocation9], %s58
      %s60 = sshll.u32 [#allocation8], 4
      %s61 = int_to_ptr.vmem [resolvable:$true] %s60
      %66 = dma.hbm_to_vmem [thread:$0]  %s5, 512, %s61, [#allocation9], 128, 128, 8
    $region25: #{tpu_custom_call.1} parent=1 // pred_fallthru
      _
    // Predicated region
    $region26: #{tpu_custom_call.1} parent=1 // pred_check
      _
    $region27: #{tpu_custom_call.1} parent=1 // pred_check_branch
      %68 = sbr.rel (0) target = $region29
    $region28: #{tpu_custom_call.1} parent=1 // pred_region
      _
    $region29: #{tpu_custom_call.1} parent=1 // pred_fallthru
      _
    // Predicated region
    $region30: #{tpu_custom_call.1} parent=1 // pred_check
      _
    $region31: #{tpu_custom_call.1} parent=1 // pred_check_branch
      %70 = sbr.rel (0) target = $region33
    $region32: #{tpu_custom_call.1} parent=1 // pred_region
      %s72 = ssub.s32 512, 512
      %73 = vsyncadd [#allocation9], %s72
      %s74 = sshll.u32 [#allocation10], 4
      %s75 = int_to_ptr.vmem [resolvable:$true] %s74
      %80 = dma.hbm_to_vmem [thread:$0]  %s7, 512, %s75, [#allocation9], 128, 128, 8
    $region33: #{tpu_custom_call.1} parent=1 // pred_fallthru
      _
    // Predicated region
    $region34: #{tpu_custom_call.1} parent=1 // pred_check
      _
    $region35: #{tpu_custom_call.1} parent=1 // pred_check_branch
      %82 = sbr.rel (0) target = $region37
    $region36: #{tpu_custom_call.1} parent=1 // pred_region
      _
    $region37: #{tpu_custom_call.1} parent=1 // pred_fallthru
      _
    // Predicated region
    $region38: #{tpu_custom_call.1} parent=1 // pred_check
      _
    $region39: #{tpu_custom_call.1} parent=1 // pred_check_branch
      %84 = sbr.rel (0) target = $region41
    $region40: #{tpu_custom_call.1} parent=1 // pred_region
      %85 = dma.done [#allocation4], 128
    $region41: #{tpu_custom_call.1} parent=1 // pred_fallthru
      _
    // Predicated region
    $region42: #{tpu_custom_call.1} parent=1 // pred_check
      _
    $region43: #{tpu_custom_call.1} parent=1 // pred_check_branch
      %87 = sbr.rel (0) target = $region45
    $region44: #{tpu_custom_call.1} parent=1 // pred_region
      %88 = dma.done [#allocation6], 256
    $region45: #{tpu_custom_call.1} parent=1 // pred_fallthru
      _
    // Predicated region
    $region46: #{tpu_custom_call.1} parent=1 // pred_check
      _
    $region47: #{tpu_custom_call.1} parent=1 // pred_check_branch
      %90 = sbr.rel (0) target = $region49
    $region48: #{tpu_custom_call.1} parent=1 // pred_region
      %91 = dma.done [#allocation6], 512
    $region49: #{tpu_custom_call.1} parent=1 // pred_fallthru
      _
    // Predicated region
    $region50: #{tpu_custom_call.1} parent=1 // pred_check
      _
    $region51: #{tpu_custom_call.1} parent=1 // pred_check_branch
      %93 = sbr.rel (0) target = $region53
    $region52: #{tpu_custom_call.1} parent=1 // pred_region
      %94 = dma.done [#allocation9], 512
    $region53: #{tpu_custom_call.1} parent=1 // pred_fallthru
      _
    // Predicated region
    $region54: #{tpu_custom_call.1} parent=1 // pred_check
      _
    $region55: #{tpu_custom_call.1} parent=1 // pred_check_branch
      %96 = sbr.rel (0) target = $region57
    $region56: #{tpu_custom_call.1} parent=1 // pred_region
      %97 = dma.done [#allocation9], 512
    $region57: #{tpu_custom_call.1} parent=1 // pred_fallthru
      _
    %v98 = vld [vmem:[#allocation3] sm:$0xff]
    %v99 = vld [vmem:[#allocation5] sm:$0xff]
    %v100 = vld [vmem:[#allocation5 + $0x8] sm:$0xff]
    %v101 = vld [vmem:[%s2] sm:$0x1]
    %v103 = vlaneseq
    %v104 = vshrl.u32 %v103, 7
    %v105 = vsub.s32 0, %v104
    %v106 = vrot.slane %v101, %v105
    %vm108 = vcmask 130048
    %v110 = vsel %vm108, %v98, 0
    %112 = vmatprep.subr.mxu0 0.0
    %113 = vmatpush1.msra.mxu0 %v99
    %114 = vmatprep.subr.mxu0 0.0
    %115 = vmatpush1.msra.mxu0 %v100
    %116 = vmatprep.subr.mxu0 0.0
    %117 = vmatpush1.msra.mxu0 0.0
    %118 = vmatprep.subr.mxu0 0.0
    %119 = vmatpush1.msra.mxu0 0.0
    %120 = vmatprep.subr.mxu0 0.0
    %121 = vmatpush1.msra.mxu0 0.0
    %122 = vmatprep.subr.mxu0 0.0
    %123 = vmatpush1.msra.mxu0 0.0
    %124 = vmatprep.subr.mxu0 0.0
    %125 = vmatpush1.msra.mxu0 0.0
    %126 = vmatprep.subr.mxu0 0.0
    %127 = vmatpush1.msra.mxu0 0.0
    %128 = vmatprep.subr.mxu0 0.0
    %129 = vmatpush1.msra.mxu0 0.0
    %130 = vmatprep.subr.mxu0 0.0
    %131 = vmatpush1.msra.mxu0 0.0
    %132 = vmatprep.subr.mxu0 0.0
    %133 = vmatpush1.msra.mxu0 0.0
    %134 = vmatprep.subr.mxu0 0.0
    %135 = vmatpush1.msra.mxu0 0.0
    %136 = vmatprep.subr.mxu0 0.0
    %137 = vmatpush1.msra.mxu0 0.0
    %138 = vmatprep.subr.mxu0 0.0
    %139 = vmatpush1.msra.mxu0 0.0
    %140 = vmatprep.subr.mxu0 0.0
    %141 = vmatpush1.msra.mxu0 0.0
    %142 = vmatprep.subr.mxu0 0.0
    %143 = vmatpush1.msra.mxu0 0.0
    %144 = vmatprep.subr.mxu0 0.0
    %145 = vmatpush1.msra.mxu0 0.0
    %146 = vmatprep.subr.mxu0 0.0
    %147 = vmatpush1.msra.mxu0 0.0
    %148 = vmatprep.subr.mxu0 0.0
    %149 = vmatpush1.msra.mxu0 0.0
    %150 = vmatprep.subr.mxu0 0.0
    %151 = vmatpush1.msra.mxu0 0.0
    %152 = vmatprep.subr.mxu0 0.0
    %153 = vmatpush1.msra.mxu0 0.0
    %154 = vmatprep.subr.mxu0 0.0
    %155 = vmatpush1.msra.mxu0 0.0
    %156 = vmatprep.subr.mxu0 0.0
    %157 = vmatpush1.msra.mxu0 0.0
    %158 = vmatprep.subr.mxu0 0.0
    %159 = vmatpush1.msra.mxu0 0.0
    %160 = vmatprep.subr.mxu0 0.0
    %161 = vmatpush1.msra.mxu0 0.0
    %162 = vmatprep.subr.mxu0 0.0
    %163 = vmatpush1.msra.mxu0 0.0
    %164 = vmatprep.subr.mxu0 0.0
    %165 = vmatpush1.msra.mxu0 0.0
    %166 = vmatprep.subr.mxu0 0.0
    %167 = vmatpush1.msra.mxu0 0.0
    %168 = vmatprep.subr.mxu0 0.0
    %169 = vmatpush1.msra.mxu0 0.0
    %170 = vmatprep.subr.mxu0 0.0
    %171 = vmatpush1.msra.mxu0 0.0
    %172 = vmatprep.subr.mxu0 0.0
    %173 = vmatpush1.msra.mxu0 0.0
    %174 = vmatprep.subr.mxu0 0.0
    %175 = vmatpush1.msra.mxu0 0.0
    %176 = vmatprep.mubr.f32.mxu0 0.0
    %177 = vmatmul.mubr.f32.gmra.mrb[0].mxu0 %v110
    %v178 = vpop.f32.mrb[0].mxu0
    %v179 = vadd.f32 %v106, %v178
    %v180 = vpop.f32.mrb[0].mxu0
    %181 = vdwg.mxu0
    %v182 = vld [vmem:[%s3] sm:$0x1]
    %v183 = vld [vmem:[#allocation7] sm:$0xff]
    %v184 = vld [vmem:[#allocation7 + $0x8] sm:$0xff]
    %v185 = vld [vmem:[#allocation7 + $0x10] sm:$0xff]
    %v186 = vld [vmem:[#allocation7 + $0x18] sm:$0xff]
    %vm187 = vcmask 261120
    %v189 = vsel %vm187, %v179, 0
    %191 = vmatprep.subr.mxu0 0.0
    %192 = vmatpush1.msra.mxu0 %v183
    %193 = vmatprep.subr.mxu0 0.0
    %194 = vmatpush1.msra.mxu0 %v184
    %195 = vmatprep.subr.mxu0 0.0
    %196 = vmatpush1.msra.mxu0 %v185
    %197 = vmatprep.subr.mxu0 0.0
    %198 = vmatpush1.msra.mxu0 %v186
    %199 = vmatprep.subr.mxu0 0.0
    %200 = vmatpush1.msra.mxu0 0.0
    %201 = vmatprep.subr.mxu0 0.0
    %202 = vmatpush1.msra.mxu0 0.0
    %203 = vmatprep.subr.mxu0 0.0
    %204 = vmatpush1.msra.mxu0 0.0
    %205 = vmatprep.subr.mxu0 0.0
    %206 = vmatpush1.msra.mxu0 0.0
    %207 = vmatprep.subr.mxu0 0.0
    %208 = vmatpush1.msra.mxu0 0.0
    %209 = vmatprep.subr.mxu0 0.0
    %210 = vmatpush1.msra.mxu0 0.0
    %211 = vmatprep.subr.mxu0 0.0
    %212 = vmatpush1.msra.mxu0 0.0
    %213 = vmatprep.subr.mxu0 0.0
    %214 = vmatpush1.msra.mxu0 0.0
    %215 = vmatprep.subr.mxu0 0.0
    %216 = vmatpush1.msra.mxu0 0.0
    %217 = vmatprep.subr.mxu0 0.0
    %218 = vmatpush1.msra.mxu0 0.0
    %219 = vmatprep.subr.mxu0 0.0
    %220 = vmatpush1.msra.mxu0 0.0
    %221 = vmatprep.subr.mxu0 0.0
    %222 = vmatpush1.msra.mxu0 0.0
    %223 = vmatprep.subr.mxu0 0.0
    %224 = vmatpush1.msra.mxu0 0.0
    %225 = vmatprep.subr.mxu0 0.0
    %226 = vmatpush1.msra.mxu0 0.0
    %227 = vmatprep.subr.mxu0 0.0
    %228 = vmatpush1.msra.mxu0 0.0
    %229 = vmatprep.subr.mxu0 0.0
    %230 = vmatpush1.msra.mxu0 0.0
    %231 = vmatprep.subr.mxu0 0.0
    %232 = vmatpush1.msra.mxu0 0.0
    %233 = vmatprep.subr.mxu0 0.0
    %234 = vmatpush1.msra.mxu0 0.0
    %235 = vmatprep.subr.mxu0 0.0
    %236 = vmatpush1.msra.mxu0 0.0
    %237 = vmatprep.subr.mxu0 0.0
    %238 = vmatpush1.msra.mxu0 0.0
    %239 = vmatprep.subr.mxu0 0.0
    %240 = vmatpush1.msra.mxu0 0.0
    %241 = vmatprep.subr.mxu0 0.0
    %242 = vmatpush1.msra.mxu0 0.0
    %243 = vmatprep.subr.mxu0 0.0
    %244 = vmatpush1.msra.mxu0 0.0
    %245 = vmatprep.subr.mxu0 0.0
    %246 = vmatpush1.msra.mxu0 0.0
    %247 = vmatprep.subr.mxu0 0.0
    %248 = vmatpush1.msra.mxu0 0.0
    %249 = vmatprep.subr.mxu0 0.0
    %250 = vmatpush1.msra.mxu0 0.0
    %251 = vmatprep.subr.mxu0 0.0
    %252 = vmatpush1.msra.mxu0 0.0
    %253 = vmatprep.subr.mxu0 0.0
    %254 = vmatpush1.msra.mxu0 0.0
    %255 = vmatprep.mubr.f32.mxu0 0.0
    %256 = vmatmul.mubr.f32.gmra.mrb[0].mxu0 %v189
    %v257 = vpop.f32.mrb[0].mxu0
    %v258 = vadd.f32 0.0, %v257
    %v259 = vpop.f32.mrb[0].mxu0
    %260 = vdwg.mxu0
    %v262 = vlaneseq
    %v263 = vshrl.u32 %v262, 7
    %v264 = vsub.s32 0, %v263
    %v265 = vrot.slane %v182, %v264
    %v267 = vadd.f32 %v265, %v258
    %v268 = vxor.u32 %v267, 2147483648
    %v269 = vmul.f32 %v268, 1.442695
    %v270 = vpow.pop %v269
    %v271 = vadd.f32 %v270, 1.0
    %v272 = vrcp.pop %v271
    %v273 = vmul.f32 1.0, %v272
    %v274 = vtanh.pop %v267
    %275 = vrot.lane.b32.xlu0 %v179, 32
    %v276 = vpop.permute.xlu0 %275
    %v278 = vmul.f32 %v273, %v276
    %280 = vrot.lane.b32.xlu0 %v274, 32
    %v281 = vpop.permute.xlu0 %280
    %v283 = vmul.f32 %v273, %v281
    %285 = vrot.lane.b32.xlu0 %v283, 32
    %v286 = vpop.permute.xlu0 %285
    %v288 = vadd.f32 %v278, %v286
    %v289 = vtanh.pop %v288
    %291 = vrot.lane.b32.xlu0 %v289, 32
    %v292 = vpop.permute.xlu0 %291
    %v294 = vmul.f32 %v273, %v292
    %296 = vrot.lane.b32.xlu0 %v294, 64
    %v297 = vpop.permute.xlu0 %296
    %299 = vst.msk [vmem:[#allocation2] sm:$0xff] %vm187, %v297
    %v300 = vld [vmem:[#allocation8] sm:$0xff]
    %v301 = vld [vmem:[#allocation8 + $0x8] sm:$0xff]
    %v302 = vld [vmem:[#allocation8 + $0x10] sm:$0xff]
    %v303 = vld [vmem:[#allocation8 + $0x18] sm:$0xff]
    %v304 = vld [vmem:[%s6] sm:$0x1]
    %v306 = vlaneseq
    %v307 = vshrl.u32 %v306, 7
    %v308 = vsub.s32 0, %v307
    %v309 = vrot.slane %v304, %v308
    %v311 = vsel %vm187, %v297, 0
    %313 = vmatprep.subr.mxu0 0.0
    %314 = vmatpush1.msra.mxu0 %v300
    %315 = vmatprep.subr.mxu0 0.0
    %316 = vmatpush1.msra.mxu0 %v301
    %317 = vmatprep.subr.mxu0 0.0
    %318 = vmatpush1.msra.mxu0 %v302
    %319 = vmatprep.subr.mxu0 0.0
    %320 = vmatpush1.msra.mxu0 %v303
    %321 = vmatprep.subr.mxu0 0.0
    %322 = vmatpush1.msra.mxu0 0.0
    %323 = vmatprep.subr.mxu0 0.0
    %324 = vmatpush1.msra.mxu0 0.0
    %325 = vmatprep.subr.mxu0 0.0
    %326 = vmatpush1.msra.mxu0 0.0
    %327 = vmatprep.subr.mxu0 0.0
    %328 = vmatpush1.msra.mxu0 0.0
    %329 = vmatprep.subr.mxu0 0.0
    %330 = vmatpush1.msra.mxu0 0.0
    %331 = vmatprep.subr.mxu0 0.0
    %332 = vmatpush1.msra.mxu0 0.0
    %333 = vmatprep.subr.mxu0 0.0
    %334 = vmatpush1.msra.mxu0 0.0
    %335 = vmatprep.subr.mxu0 0.0
    %336 = vmatpush1.msra.mxu0 0.0
    %337 = vmatprep.subr.mxu0 0.0
    %338 = vmatpush1.msra.mxu0 0.0
    %339 = vmatprep.subr.mxu0 0.0
    %340 = vmatpush1.msra.mxu0 0.0
    %341 = vmatprep.subr.mxu0 0.0
    %342 = vmatpush1.msra.mxu0 0.0
    %343 = vmatprep.subr.mxu0 0.0
    %344 = vmatpush1.msra.mxu0 0.0
    %345 = vmatprep.subr.mxu0 0.0
    %346 = vmatpush1.msra.mxu0 0.0
    %347 = vmatprep.subr.mxu0 0.0
    %348 = vmatpush1.msra.mxu0 0.0
    %349 = vmatprep.subr.mxu0 0.0
    %350 = vmatpush1.msra.mxu0 0.0
    %351 = vmatprep.subr.mxu0 0.0
    %352 = vmatpush1.msra.mxu0 0.0
    %353 = vmatprep.subr.mxu0 0.0
    %354 = vmatpush1.msra.mxu0 0.0
    %355 = vmatprep.subr.mxu0 0.0
    %356 = vmatpush1.msra.mxu0 0.0
    %357 = vmatprep.subr.mxu0 0.0
    %358 = vmatpush1.msra.mxu0 0.0
    %359 = vmatprep.subr.mxu0 0.0
    %360 = vmatpush1.msra.mxu0 0.0
    %361 = vmatprep.subr.mxu0 0.0
    %362 = vmatpush1.msra.mxu0 0.0
    %363 = vmatprep.subr.mxu0 0.0
    %364 = vmatpush1.msra.mxu0 0.0
    %365 = vmatprep.subr.mxu0 0.0
    %366 = vmatpush1.msra.mxu0 0.0
    %367 = vmatprep.subr.mxu0 0.0
    %368 = vmatpush1.msra.mxu0 0.0
    %369 = vmatprep.subr.mxu0 0.0
    %370 = vmatpush1.msra.mxu0 0.0
    %371 = vmatprep.subr.mxu0 0.0
    %372 = vmatpush1.msra.mxu0 0.0
    %373 = vmatprep.subr.mxu0 0.0
    %374 = vmatpush1.msra.mxu0 0.0
    %375 = vmatprep.subr.mxu0 0.0
    %376 = vmatpush1.msra.mxu0 0.0
    %377 = vmatprep.mubr.f32.mxu0 0.0
    %378 = vmatmul.mubr.f32.gmra.mrb[0].mxu0 %v311
    %v379 = vpop.f32.mrb[0].mxu0
    %v380 = vadd.f32 %v309, %v379
    %v381 = vpop.f32.mrb[0].mxu0
    %382 = vdwg.mxu0
    %v383 = vxor.u32 %v380, 2147483648
    %v384 = vmul.f32 %v383, 1.442695
    %v385 = vpow.pop %v384
    %v386 = vadd.f32 %v385, 1.0
    %v387 = vrcp.pop %v386
    %v388 = vmul.f32 1.0, %v387
    %v389 = vtanh.pop %v380
    %v390 = vmul.f32 %v388, %v288
    %392 = vrot.lane.b32.xlu0 %v389, 32
    %v393 = vpop.permute.xlu0 %392
    %v395 = vmul.f32 %v388, %v393
    %397 = vrot.lane.b32.xlu0 %v395, 32
    %v398 = vpop.permute.xlu0 %397
    %v400 = vadd.f32 %v390, %v398
    %v401 = vtanh.pop %v400
    %403 = vrot.lane.b32.xlu0 %v401, 32
    %v404 = vpop.permute.xlu0 %403
    %v406 = vmul.f32 %v388, %v404
    %408 = vrot.lane.b32.xlu0 %v406, 64
    %v409 = vpop.permute.xlu0 %408
    %411 = vst.msk [vmem:[#allocation2 + $0x8] sm:$0xff] %vm187, %v409
    %v412 = vld [vmem:[#allocation8] sm:$0xff]
    %v413 = vld [vmem:[#allocation8 + $0x8] sm:$0xff]
    %v414 = vld [vmem:[#allocation8 + $0x10] sm:$0xff]
    %v415 = vld [vmem:[#allocation8 + $0x18] sm:$0xff]
    %v416 = vld [vmem:[%s6] sm:$0x1]
    %v418 = vlaneseq
    %v419 = vshrl.u32 %v418, 7
    %v420 = vsub.s32 0, %v419
    %v421 = vrot.slane %v416, %v420
    %v423 = vsel %vm187, %v409, 0
    %425 = vmatprep.subr.mxu0 0.0
    %426 = vmatpush1.msra.mxu0 %v412
    %427 = vmatprep.subr.mxu0 0.0
    %428 = vmatpush1.msra.mxu0 %v413
    %429 = vmatprep.subr.mxu0 0.0
    %430 = vmatpush1.msra.mxu0 %v414
    %431 = vmatprep.subr.mxu0 0.0
    %432 = vmatpush1.msra.mxu0 %v415
    %433 = vmatprep.subr.mxu0 0.0
    %434 = vmatpush1.msra.mxu0 0.0
    %435 = vmatprep.subr.mxu0 0.0
    %436 = vmatpush1.msra.mxu0 0.0
    %437 = vmatprep.subr.mxu0 0.0
    %438 = vmatpush1.msra.mxu0 0.0
    %439 = vmatprep.subr.mxu0 0.0
    %440 = vmatpush1.msra.mxu0 0.0
    %441 = vmatprep.subr.mxu0 0.0
    %442 = vmatpush1.msra.mxu0 0.0
    %443 = vmatprep.subr.mxu0 0.0
    %444 = vmatpush1.msra.mxu0 0.0
    %445 = vmatprep.subr.mxu0 0.0
    %446 = vmatpush1.msra.mxu0 0.0
    %447 = vmatprep.subr.mxu0 0.0
    %448 = vmatpush1.msra.mxu0 0.0
    %449 = vmatprep.subr.mxu0 0.0
    %450 = vmatpush1.msra.mxu0 0.0
    %451 = vmatprep.subr.mxu0 0.0
    %452 = vmatpush1.msra.mxu0 0.0
    %453 = vmatprep.subr.mxu0 0.0
    %454 = vmatpush1.msra.mxu0 0.0
    %455 = vmatprep.subr.mxu0 0.0
    %456 = vmatpush1.msra.mxu0 0.0
    %457 = vmatprep.subr.mxu0 0.0
    %458 = vmatpush1.msra.mxu0 0.0
    %459 = vmatprep.subr.mxu0 0.0
    %460 = vmatpush1.msra.mxu0 0.0
    %461 = vmatprep.subr.mxu0 0.0
    %462 = vmatpush1.msra.mxu0 0.0
    %463 = vmatprep.subr.mxu0 0.0
    %464 = vmatpush1.msra.mxu0 0.0
    %465 = vmatprep.subr.mxu0 0.0
    %466 = vmatpush1.msra.mxu0 0.0
    %467 = vmatprep.subr.mxu0 0.0
    %468 = vmatpush1.msra.mxu0 0.0
    %469 = vmatprep.subr.mxu0 0.0
    %470 = vmatpush1.msra.mxu0 0.0
    %471 = vmatprep.subr.mxu0 0.0
    %472 = vmatpush1.msra.mxu0 0.0
    %473 = vmatprep.subr.mxu0 0.0
    %474 = vmatpush1.msra.mxu0 0.0
    %475 = vmatprep.subr.mxu0 0.0
    %476 = vmatpush1.msra.mxu0 0.0
    %477 = vmatprep.subr.mxu0 0.0
    %478 = vmatpush1.msra.mxu0 0.0
    %479 = vmatprep.subr.mxu0 0.0
    %480 = vmatpush1.msra.mxu0 0.0
    %481 = vmatprep.subr.mxu0 0.0
    %482 = vmatpush1.msra.mxu0 0.0
    %483 = vmatprep.subr.mxu0 0.0
    %484 = vmatpush1.msra.mxu0 0.0
    %485 = vmatprep.subr.mxu0 0.0
    %486 = vmatpush1.msra.mxu0 0.0
    %487 = vmatprep.subr.mxu0 0.0
    %488 = vmatpush1.msra.mxu0 0.0
    %489 = vmatprep.mubr.f32.mxu0 0.0
    %490 = vmatmul.mubr.f32.gmra.mrb[0].mxu0 %v423
    %v491 = vpop.f32.mrb[0].mxu0
    %v492 = vadd.f32 %v421, %v491
    %v493 = vpop.f32.mrb[0].mxu0
    %494 = vdwg.mxu0
    %v495 = vxor.u32 %v492, 2147483648
    %v496 = vmul.f32 %v495, 1.442695
    %v497 = vpow.pop %v496
    %v498 = vadd.f32 %v497, 1.0
    %v499 = vrcp.pop %v498
    %v500 = vmul.f32 1.0, %v499
    %v501 = vtanh.pop %v492
    %v502 = vmul.f32 %v500, %v400
    %504 = vrot.lane.b32.xlu0 %v501, 32
    %v505 = vpop.permute.xlu0 %504
    %v507 = vmul.f32 %v500, %v505
    %509 = vrot.lane.b32.xlu0 %v507, 32
    %v510 = vpop.permute.xlu0 %509
    %v512 = vadd.f32 %v502, %v510
    %v513 = vtanh.pop %v512
    %515 = vrot.lane.b32.xlu0 %v513, 32
    %v516 = vpop.permute.xlu0 %515
    %v518 = vmul.f32 %v500, %v516
    %520 = vrot.lane.b32.xlu0 %v518, 64
    %v521 = vpop.permute.xlu0 %520
    %523 = vst.msk [vmem:[#allocation2 + $0x10] sm:$0xff] %vm187, %v521
    %v524 = vld [vmem:[#allocation8] sm:$0xff]
    %v525 = vld [vmem:[#allocation8 + $0x8] sm:$0xff]
    %v526 = vld [vmem:[#allocation8 + $0x10] sm:$0xff]
    %v527 = vld [vmem:[#allocation8 + $0x18] sm:$0xff]
    %v528 = vld [vmem:[%s6] sm:$0x1]
    %v530 = vlaneseq
    %v531 = vshrl.u32 %v530, 7
    %v532 = vsub.s32 0, %v531
    %v533 = vrot.slane %v528, %v532
    %v535 = vsel %vm187, %v521, 0
    %537 = vmatprep.subr.mxu0 0.0
    %538 = vmatpush1.msra.mxu0 %v524
    %539 = vmatprep.subr.mxu0 0.0
    %540 = vmatpush1.msra.mxu0 %v525
    %541 = vmatprep.subr.mxu0 0.0
    %542 = vmatpush1.msra.mxu0 %v526
    %543 = vmatprep.subr.mxu0 0.0
    %544 = vmatpush1.msra.mxu0 %v527
    %545 = vmatprep.subr.mxu0 0.0
    %546 = vmatpush1.msra.mxu0 0.0
    %547 = vmatprep.subr.mxu0 0.0
    %548 = vmatpush1.msra.mxu0 0.0
    %549 = vmatprep.subr.mxu0 0.0
    %550 = vmatpush1.msra.mxu0 0.0
    %551 = vmatprep.subr.mxu0 0.0
    %552 = vmatpush1.msra.mxu0 0.0
    %553 = vmatprep.subr.mxu0 0.0
    %554 = vmatpush1.msra.mxu0 0.0
    %555 = vmatprep.subr.mxu0 0.0
    %556 = vmatpush1.msra.mxu0 0.0
    %557 = vmatprep.subr.mxu0 0.0
    %558 = vmatpush1.msra.mxu0 0.0
    %559 = vmatprep.subr.mxu0 0.0
    %560 = vmatpush1.msra.mxu0 0.0
    %561 = vmatprep.subr.mxu0 0.0
    %562 = vmatpush1.msra.mxu0 0.0
    %563 = vmatprep.subr.mxu0 0.0
    %564 = vmatpush1.msra.mxu0 0.0
    %565 = vmatprep.subr.mxu0 0.0
    %566 = vmatpush1.msra.mxu0 0.0
    %567 = vmatprep.subr.mxu0 0.0
    %568 = vmatpush1.msra.mxu0 0.0
    %569 = vmatprep.subr.mxu0 0.0
    %570 = vmatpush1.msra.mxu0 0.0
    %571 = vmatprep.subr.mxu0 0.0
    %572 = vmatpush1.msra.mxu0 0.0
    %573 = vmatprep.subr.mxu0 0.0
    %574 = vmatpush1.msra.mxu0 0.0
    %575 = vmatprep.subr.mxu0 0.0
    %576 = vmatpush1.msra.mxu0 0.0
    %577 = vmatprep.subr.mxu0 0.0
    %578 = vmatpush1.msra.mxu0 0.0
    %579 = vmatprep.subr.mxu0 0.0
    %580 = vmatpush1.msra.mxu0 0.0
    %581 = vmatprep.subr.mxu0 0.0
    %582 = vmatpush1.msra.mxu0 0.0
    %583 = vmatprep.subr.mxu0 0.0
    %584 = vmatpush1.msra.mxu0 0.0
    %585 = vmatprep.subr.mxu0 0.0
    %586 = vmatpush1.msra.mxu0 0.0
    %587 = vmatprep.subr.mxu0 0.0
    %588 = vmatpush1.msra.mxu0 0.0
    %589 = vmatprep.subr.mxu0 0.0
    %590 = vmatpush1.msra.mxu0 0.0
    %591 = vmatprep.subr.mxu0 0.0
    %592 = vmatpush1.msra.mxu0 0.0
    %593 = vmatprep.subr.mxu0 0.0
    %594 = vmatpush1.msra.mxu0 0.0
    %595 = vmatprep.subr.mxu0 0.0
    %596 = vmatpush1.msra.mxu0 0.0
    %597 = vmatprep.subr.mxu0 0.0
    %598 = vmatpush1.msra.mxu0 0.0
    %599 = vmatprep.subr.mxu0 0.0
    %600 = vmatpush1.msra.mxu0 0.0
    %601 = vmatprep.mubr.f32.mxu0 0.0
    %602 = vmatmul.mubr.f32.gmra.mrb[0].mxu0 %v535
    %v603 = vpop.f32.mrb[0].mxu0
    %v604 = vadd.f32 %v533, %v603
    %v605 = vpop.f32.mrb[0].mxu0
    %606 = vdwg.mxu0
    %v607 = vxor.u32 %v604, 2147483648
    %v608 = vmul.f32 %v607, 1.442695
    %v609 = vpow.pop %v608
    %v610 = vadd.f32 %v609, 1.0
    %v611 = vrcp.pop %v610
    %v612 = vmul.f32 1.0, %v611
    %v613 = vtanh.pop %v604
    %v614 = vmul.f32 %v612, %v512
    %616 = vrot.lane.b32.xlu0 %v613, 32
    %v617 = vpop.permute.xlu0 %616
    %v619 = vmul.f32 %v612, %v617
    %621 = vrot.lane.b32.xlu0 %v619, 32
    %v622 = vpop.permute.xlu0 %621
    %v624 = vadd.f32 %v614, %v622
    %v625 = vtanh.pop %v624
    %627 = vrot.lane.b32.xlu0 %v625, 32
    %v628 = vpop.permute.xlu0 %627
    %v630 = vmul.f32 %v612, %v628
    %632 = vrot.lane.b32.xlu0 %v630, 64
    %v633 = vpop.permute.xlu0 %632
    %635 = vst.msk [vmem:[#allocation2 + $0x18] sm:$0xff] %vm187, %v633
    %v636 = vld [vmem:[#allocation8] sm:$0xff]
    %v637 = vld [vmem:[#allocation8 + $0x8] sm:$0xff]
    %v638 = vld [vmem:[#allocation8 + $0x10] sm:$0xff]
    %v639 = vld [vmem:[#allocation8 + $0x18] sm:$0xff]
    %v640 = vld [vmem:[%s6] sm:$0x1]
    %v642 = vlaneseq
    %v643 = vshrl.u32 %v642, 7
    %v644 = vsub.s32 0, %v643
    %v645 = vrot.slane %v640, %v644
    %v647 = vsel %vm187, %v633, 0
    %649 = vmatprep.subr.mxu0 0.0
    %650 = vmatpush1.msra.mxu0 %v636
    %651 = vmatprep.subr.mxu0 0.0
    %652 = vmatpush1.msra.mxu0 %v637
    %653 = vmatprep.subr.mxu0 0.0
    %654 = vmatpush1.msra.mxu0 %v638
    %655 = vmatprep.subr.mxu0 0.0
    %656 = vmatpush1.msra.mxu0 %v639
    %657 = vmatprep.subr.mxu0 0.0
    %658 = vmatpush1.msra.mxu0 0.0
    %659 = vmatprep.subr.mxu0 0.0
    %660 = vmatpush1.msra.mxu0 0.0
    %661 = vmatprep.subr.mxu0 0.0
    %662 = vmatpush1.msra.mxu0 0.0
    %663 = vmatprep.subr.mxu0 0.0
    %664 = vmatpush1.msra.mxu0 0.0
    %665 = vmatprep.subr.mxu0 0.0
    %666 = vmatpush1.msra.mxu0 0.0
    %667 = vmatprep.subr.mxu0 0.0
    %668 = vmatpush1.msra.mxu0 0.0
    %669 = vmatprep.subr.mxu0 0.0
    %670 = vmatpush1.msra.mxu0 0.0
    %671 = vmatprep.subr.mxu0 0.0
    %672 = vmatpush1.msra.mxu0 0.0
    %673 = vmatprep.subr.mxu0 0.0
    %674 = vmatpush1.msra.mxu0 0.0
    %675 = vmatprep.subr.mxu0 0.0
    %676 = vmatpush1.msra.mxu0 0.0
    %677 = vmatprep.subr.mxu0 0.0
    %678 = vmatpush1.msra.mxu0 0.0
    %679 = vmatprep.subr.mxu0 0.0
    %680 = vmatpush1.msra.mxu0 0.0
    %681 = vmatprep.subr.mxu0 0.0
    %682 = vmatpush1.msra.mxu0 0.0
    %683 = vmatprep.subr.mxu0 0.0
    %684 = vmatpush1.msra.mxu0 0.0
    %685 = vmatprep.subr.mxu0 0.0
    %686 = vmatpush1.msra.mxu0 0.0
    %687 = vmatprep.subr.mxu0 0.0
    %688 = vmatpush1.msra.mxu0 0.0
    %689 = vmatprep.subr.mxu0 0.0
    %690 = vmatpush1.msra.mxu0 0.0
    %691 = vmatprep.subr.mxu0 0.0
    %692 = vmatpush1.msra.mxu0 0.0
    %693 = vmatprep.subr.mxu0 0.0
    %694 = vmatpush1.msra.mxu0 0.0
    %695 = vmatprep.subr.mxu0 0.0
    %696 = vmatpush1.msra.mxu0 0.0
    %697 = vmatprep.subr.mxu0 0.0
    %698 = vmatpush1.msra.mxu0 0.0
    %699 = vmatprep.subr.mxu0 0.0
    %700 = vmatpush1.msra.mxu0 0.0
    %701 = vmatprep.subr.mxu0 0.0
    %702 = vmatpush1.msra.mxu0 0.0
    %703 = vmatprep.subr.mxu0 0.0
    %704 = vmatpush1.msra.mxu0 0.0
    %705 = vmatprep.subr.mxu0 0.0
    %706 = vmatpush1.msra.mxu0 0.0
    %707 = vmatprep.subr.mxu0 0.0
    %708 = vmatpush1.msra.mxu0 0.0
    %709 = vmatprep.subr.mxu0 0.0
    %710 = vmatpush1.msra.mxu0 0.0
    %711 = vmatprep.subr.mxu0 0.0
    %712 = vmatpush1.msra.mxu0 0.0
    %713 = vmatprep.mubr.f32.mxu0 0.0
    %714 = vmatmul.mubr.f32.gmra.mrb[0].mxu0 %v647
    %v715 = vpop.f32.mrb[0].mxu0
    %v716 = vadd.f32 %v645, %v715
    %v717 = vpop.f32.mrb[0].mxu0
    %718 = vdwg.mxu0
    %v719 = vxor.u32 %v716, 2147483648
    %v720 = vmul.f32 %v719, 1.442695
    %v721 = vpow.pop %v720
    %v722 = vadd.f32 %v721, 1.0
    %v723 = vrcp.pop %v722
    %v724 = vmul.f32 1.0, %v723
    %v725 = vtanh.pop %v716
    %v726 = vmul.f32 %v724, %v624
    %728 = vrot.lane.b32.xlu0 %v725, 32
    %v729 = vpop.permute.xlu0 %728
    %v731 = vmul.f32 %v724, %v729
    %733 = vrot.lane.b32.xlu0 %v731, 32
    %v734 = vpop.permute.xlu0 %733
    %v736 = vadd.f32 %v726, %v734
    %v737 = vtanh.pop %v736
    %739 = vrot.lane.b32.xlu0 %v737, 32
    %v740 = vpop.permute.xlu0 %739
    %v742 = vmul.f32 %v724, %v740
    %744 = vrot.lane.b32.xlu0 %v742, 64
    %v745 = vpop.permute.xlu0 %744
    %747 = vst.msk [vmem:[#allocation2 + $0x20] sm:$0xff] %vm187, %v745
    %v748 = vld [vmem:[#allocation8] sm:$0xff]
    %v749 = vld [vmem:[#allocation8 + $0x8] sm:$0xff]
    %v750 = vld [vmem:[#allocation8 + $0x10] sm:$0xff]
    %v751 = vld [vmem:[#allocation8 + $0x18] sm:$0xff]
    %v752 = vld [vmem:[%s6] sm:$0x1]
    %v754 = vlaneseq
    %v755 = vshrl.u32 %v754, 7
    %v756 = vsub.s32 0, %v755
    %v757 = vrot.slane %v752, %v756
    %v759 = vsel %vm187, %v745, 0
    %761 = vmatprep.subr.mxu0 0.0
    %762 = vmatpush1.msra.mxu0 %v748
    %763 = vmatprep.subr.mxu0 0.0
    %764 = vmatpush1.msra.mxu0 %v749
    %765 = vmatprep.subr.mxu0 0.0
    %766 = vmatpush1.msra.mxu0 %v750
    %767 = vmatprep.subr.mxu0 0.0
    %768 = vmatpush1.msra.mxu0 %v751
    %769 = vmatprep.subr.mxu0 0.0
    %770 = vmatpush1.msra.mxu0 0.0
    %771 = vmatprep.subr.mxu0 0.0
    %772 = vmatpush1.msra.mxu0 0.0
    %773 = vmatprep.subr.mxu0 0.0
    %774 = vmatpush1.msra.mxu0 0.0
    %775 = vmatprep.subr.mxu0 0.0
    %776 = vmatpush1.msra.mxu0 0.0
    %777 = vmatprep.subr.mxu0 0.0
    %778 = vmatpush1.msra.mxu0 0.0
    %779 = vmatprep.subr.mxu0 0.0
    %780 = vmatpush1.msra.mxu0 0.0
    %781 = vmatprep.subr.mxu0 0.0
    %782 = vmatpush1.msra.mxu0 0.0
    %783 = vmatprep.subr.mxu0 0.0
    %784 = vmatpush1.msra.mxu0 0.0
    %785 = vmatprep.subr.mxu0 0.0
    %786 = vmatpush1.msra.mxu0 0.0
    %787 = vmatprep.subr.mxu0 0.0
    %788 = vmatpush1.msra.mxu0 0.0
    %789 = vmatprep.subr.mxu0 0.0
    %790 = vmatpush1.msra.mxu0 0.0
    %791 = vmatprep.subr.mxu0 0.0
    %792 = vmatpush1.msra.mxu0 0.0
    %793 = vmatprep.subr.mxu0 0.0
    %794 = vmatpush1.msra.mxu0 0.0
    %795 = vmatprep.subr.mxu0 0.0
    %796 = vmatpush1.msra.mxu0 0.0
    %797 = vmatprep.subr.mxu0 0.0
    %798 = vmatpush1.msra.mxu0 0.0
    %799 = vmatprep.subr.mxu0 0.0
    %800 = vmatpush1.msra.mxu0 0.0
    %801 = vmatprep.subr.mxu0 0.0
    %802 = vmatpush1.msra.mxu0 0.0
    %803 = vmatprep.subr.mxu0 0.0
    %804 = vmatpush1.msra.mxu0 0.0
    %805 = vmatprep.subr.mxu0 0.0
    %806 = vmatpush1.msra.mxu0 0.0
    %807 = vmatprep.subr.mxu0 0.0
    %808 = vmatpush1.msra.mxu0 0.0
    %809 = vmatprep.subr.mxu0 0.0
    %810 = vmatpush1.msra.mxu0 0.0
    %811 = vmatprep.subr.mxu0 0.0
    %812 = vmatpush1.msra.mxu0 0.0
    %813 = vmatprep.subr.mxu0 0.0
    %814 = vmatpush1.msra.mxu0 0.0
    %815 = vmatprep.subr.mxu0 0.0
    %816 = vmatpush1.msra.mxu0 0.0
    %817 = vmatprep.subr.mxu0 0.0
    %818 = vmatpush1.msra.mxu0 0.0
    %819 = vmatprep.subr.mxu0 0.0
    %820 = vmatpush1.msra.mxu0 0.0
    %821 = vmatprep.subr.mxu0 0.0
    %822 = vmatpush1.msra.mxu0 0.0
    %823 = vmatprep.subr.mxu0 0.0
    %824 = vmatpush1.msra.mxu0 0.0
    %825 = vmatprep.mubr.f32.mxu0 0.0
    %826 = vmatmul.mubr.f32.gmra.mrb[0].mxu0 %v759
    %v827 = vpop.f32.mrb[0].mxu0
    %v828 = vadd.f32 %v757, %v827
    %v829 = vpop.f32.mrb[0].mxu0
    %830 = vdwg.mxu0
    %v831 = vxor.u32 %v828, 2147483648
    %v832 = vmul.f32 %v831, 1.442695
    %v833 = vpow.pop %v832
    %v834 = vadd.f32 %v833, 1.0
    %v835 = vrcp.pop %v834
    %v836 = vmul.f32 1.0, %v835
    %v837 = vtanh.pop %v828
    %v838 = vmul.f32 %v836, %v736
    %840 = vrot.lane.b32.xlu0 %v837, 32
    %v841 = vpop.permute.xlu0 %840
    %v843 = vmul.f32 %v836, %v841
    %845 = vrot.lane.b32.xlu0 %v843, 32
    %v846 = vpop.permute.xlu0 %845
    %v848 = vadd.f32 %v838, %v846
    %v849 = vtanh.pop %v848
    %851 = vrot.lane.b32.xlu0 %v849, 32
    %v852 = vpop.permute.xlu0 %851
    %v854 = vmul.f32 %v836, %v852
    %856 = vrot.lane.b32.xlu0 %v854, 64
    %v857 = vpop.permute.xlu0 %856
    %859 = vst.msk [vmem:[#allocation2 + $0x28] sm:$0xff] %vm187, %v857
    %v860 = vld [vmem:[#allocation2] sm:$0xff]
    %v861 = vld [vmem:[#allocation2 + $0x8] sm:$0xff]
    %v862 = vld [vmem:[#allocation2 + $0x10] sm:$0xff]
    %v863 = vld [vmem:[#allocation2 + $0x18] sm:$0xff]
    %v864 = vld [vmem:[#allocation2 + $0x20] sm:$0xff]
    %v865 = vld [vmem:[#allocation2 + $0x28] sm:$0xff]
    %v866 = vld [vmem:[#allocation10] sm:$0xff]
    %v867 = vld [vmem:[#allocation10 + $0x8] sm:$0xff]
    %v868 = vld [vmem:[#allocation10 + $0x10] sm:$0xff]
    %v869 = vld [vmem:[#allocation10 + $0x18] sm:$0xff]
    %v870 = vld [vmem:[%s8] sm:$0x1]
    %v872 = vlaneseq
    %v873 = vshrl.u32 %v872, 7
    %v874 = vsub.s32 0, %v873
    %v875 = vrot.slane %v870, %v874
    %v878 = vsel %vm187, %v860, 0
    %v881 = vsel %vm187, %v861, 0
    %v884 = vsel %vm187, %v862, 0
    %v887 = vsel %vm187, %v863, 0
    %v890 = vsel %vm187, %v864, 0
    %v893 = vsel %vm187, %v865, 0
    %895 = vmatprep.subr.mxu0 0.0
    %896 = vmatpush1.msra.mxu0 %v866
    %897 = vmatprep.subr.mxu0 0.0
    %898 = vmatpush1.msra.mxu0 %v867
    %899 = vmatprep.subr.mxu0 0.0
    %900 = vmatpush1.msra.mxu0 %v868
    %901 = vmatprep.subr.mxu0 0.0
    %902 = vmatpush1.msra.mxu0 %v869
    %903 = vmatprep.subr.mxu0 0.0
    %904 = vmatpush1.msra.mxu0 0.0
    %905 = vmatprep.subr.mxu0 0.0
    %906 = vmatpush1.msra.mxu0 0.0
    %907 = vmatprep.subr.mxu0 0.0
    %908 = vmatpush1.msra.mxu0 0.0
    %909 = vmatprep.subr.mxu0 0.0
    %910 = vmatpush1.msra.mxu0 0.0
    %911 = vmatprep.subr.mxu0 0.0
    %912 = vmatpush1.msra.mxu0 0.0
    %913 = vmatprep.subr.mxu0 0.0
    %914 = vmatpush1.msra.mxu0 0.0
    %915 = vmatprep.subr.mxu0 0.0
    %916 = vmatpush1.msra.mxu0 0.0
    %917 = vmatprep.subr.mxu0 0.0
    %918 = vmatpush1.msra.mxu0 0.0
    %919 = vmatprep.subr.mxu0 0.0
    %920 = vmatpush1.msra.mxu0 0.0
    %921 = vmatprep.subr.mxu0 0.0
    %922 = vmatpush1.msra.mxu0 0.0
    %923 = vmatprep.subr.mxu0 0.0
    %924 = vmatpush1.msra.mxu0 0.0
    %925 = vmatprep.subr.mxu0 0.0
    %926 = vmatpush1.msra.mxu0 0.0
    %927 = vmatprep.subr.mxu0 0.0
    %928 = vmatpush1.msra.mxu0 0.0
    %929 = vmatprep.subr.mxu0 0.0
    %930 = vmatpush1.msra.mxu0 0.0
    %931 = vmatprep.subr.mxu0 0.0
    %932 = vmatpush1.msra.mxu0 0.0
    %933 = vmatprep.subr.mxu0 0.0
    %934 = vmatpush1.msra.mxu0 0.0
    %935 = vmatprep.subr.mxu0 0.0
    %936 = vmatpush1.msra.mxu0 0.0
    %937 = vmatprep.subr.mxu0 0.0
    %938 = vmatpush1.msra.mxu0 0.0
    %939 = vmatprep.subr.mxu0 0.0
    %940 = vmatpush1.msra.mxu0 0.0
    %941 = vmatprep.subr.mxu0 0.0
    %942 = vmatpush1.msra.mxu0 0.0
    %943 = vmatprep.subr.mxu0 0.0
    %944 = vmatpush1.msra.mxu0 0.0
    %945 = vmatprep.subr.mxu0 0.0
    %946 = vmatpush1.msra.mxu0 0.0
    %947 = vmatprep.subr.mxu0 0.0
    %948 = vmatpush1.msra.mxu0 0.0
    %949 = vmatprep.subr.mxu0 0.0
    %950 = vmatpush1.msra.mxu0 0.0
    %951 = vmatprep.subr.mxu0 0.0
    %952 = vmatpush1.msra.mxu0 0.0
    %953 = vmatprep.subr.mxu0 0.0
    %954 = vmatpush1.msra.mxu0 0.0
    %955 = vmatprep.subr.mxu0 0.0
    %956 = vmatpush1.msra.mxu0 0.0
    %957 = vmatprep.subr.mxu0 0.0
    %958 = vmatpush1.msra.mxu0 0.0
    %959 = vmatprep.mubr.f32.mxu0 0.0
    %960 = vmatmul.mubr.f32.gmra.mrb[0].mxu0 %v878
    %v961 = vpop.f32.mrb[0].mxu0
    %v962 = vadd.f32 %v875, %v961
    %v963 = vpop.f32.mrb[0].mxu0
    %964 = vmatprep.mubr.f32.mxu0 0.0
    %965 = vmatmul.mubr.f32.gmra.mrb[0].mxu0 %v881
    %v966 = vpop.f32.mrb[0].mxu0
    %v967 = vadd.f32 %v875, %v966
    %v968 = vpop.f32.mrb[0].mxu0
    %969 = vmatprep.mubr.f32.mxu0 0.0
    %970 = vmatmul.mubr.f32.gmra.mrb[0].mxu0 %v884
    %v971 = vpop.f32.mrb[0].mxu0
    %v972 = vadd.f32 %v875, %v971
    %v973 = vpop.f32.mrb[0].mxu0
    %974 = vmatprep.mubr.f32.mxu0 0.0
    %975 = vmatmul.mubr.f32.gmra.mrb[0].mxu0 %v887
    %v976 = vpop.f32.mrb[0].mxu0
    %v977 = vadd.f32 %v875, %v976
    %v978 = vpop.f32.mrb[0].mxu0
    %979 = vmatprep.mubr.f32.mxu0 0.0
    %980 = vmatmul.mubr.f32.gmra.mrb[0].mxu0 %v890
    %v981 = vpop.f32.mrb[0].mxu0
    %v982 = vadd.f32 %v875, %v981
    %v983 = vpop.f32.mrb[0].mxu0
    %984 = vmatprep.mubr.f32.mxu0 0.0
    %985 = vmatmul.mubr.f32.gmra.mrb[0].mxu0 %v893
    %v986 = vpop.f32.mrb[0].mxu0
    %v987 = vadd.f32 %v875, %v986
    %v988 = vpop.f32.mrb[0].mxu0
    %989 = vdwg.mxu0
    %v990 = vsel %vm187, %v962, -inf
    %991 = vmax.xlane.f32.xlu0 %v990
    %v992 = vpop.xlane.xlu0 %991
    %v993 = vsel %vm187, %v967, -inf
    %994 = vmax.xlane.f32.xlu0 %v993
    %v995 = vpop.xlane.xlu0 %994
    %v996 = vsel %vm187, %v972, -inf
    %997 = vmax.xlane.f32.xlu0 %v996
    %v998 = vpop.xlane.xlu0 %997
    %v999 = vsel %vm187, %v977, -inf
    %1000 = vmax.xlane.f32.xlu0 %v999
    %v1001 = vpop.xlane.xlu0 %1000
    %v1002 = vsel %vm187, %v982, -inf
    %1003 = vmax.xlane.f32.xlu0 %v1002
    %v1004 = vpop.xlane.xlu0 %1003
    %v1005 = vsel %vm187, %v987, -inf
    %1006 = vmax.xlane.f32.xlu0 %v1005
    %v1007 = vpop.xlane.xlu0 %1006
    %v1008 = vsub.f32 %v962, %v992
    %v1009 = vsub.f32 %v967, %v995
    %v1010 = vsub.f32 %v972, %v998
    %v1011 = vsub.f32 %v977, %v1001
    %v1012 = vsub.f32 %v982, %v1004
    %v1013 = vsub.f32 %v987, %v1007
    %v1014 = vmul.f32 %v1008, 1.442695
    %v1015 = vpow.pop %v1014
    %v1016 = vmul.f32 %v1009, 1.442695
    %v1017 = vpow.pop %v1016
    %v1018 = vmul.f32 %v1010, 1.442695
    %v1019 = vpow.pop %v1018
    %v1020 = vmul.f32 %v1011, 1.442695
    %v1021 = vpow.pop %v1020
    %v1022 = vmul.f32 %v1012, 1.442695
    %v1023 = vpow.pop %v1022
    %v1024 = vmul.f32 %v1013, 1.442695
    %v1025 = vpow.pop %v1024
    %v1026 = vsel %vm187, %v1015, 0.0
    %1027 = vadd.xlane.f32.xlu0 %v1026
    %v1028 = vpop.xlane.xlu0 %1027
    %v1029 = vsel %vm187, %v1017, 0.0
    %1030 = vadd.xlane.f32.xlu0 %v1029
    %v1031 = vpop.xlane.xlu0 %1030
    %v1032 = vsel %vm187, %v1019, 0.0
    %1033 = vadd.xlane.f32.xlu0 %v1032
    %v1034 = vpop.xlane.xlu0 %1033
    %v1035 = vsel %vm187, %v1021, 0.0
    %1036 = vadd.xlane.f32.xlu0 %v1035
    %v1037 = vpop.xlane.xlu0 %1036
    %v1038 = vsel %vm187, %v1023, 0.0
    %1039 = vadd.xlane.f32.xlu0 %v1038
    %v1040 = vpop.xlane.xlu0 %1039
    %v1041 = vsel %vm187, %v1025, 0.0
    %1042 = vadd.xlane.f32.xlu0 %v1041
    %v1043 = vpop.xlane.xlu0 %1042
    %v1044 = vlog2.pop %v1028
    %v1045 = vmul.f32 %v1044, 0.6931472
    %v1046 = vlog2.pop %v1031
    %v1047 = vmul.f32 %v1046, 0.6931472
    %v1048 = vlog2.pop %v1034
    %v1049 = vmul.f32 %v1048, 0.6931472
    %v1050 = vlog2.pop %v1037
    %v1051 = vmul.f32 %v1050, 0.6931472
    %v1052 = vlog2.pop %v1040
    %v1053 = vmul.f32 %v1052, 0.6931472
    %v1054 = vlog2.pop %v1043
    %v1055 = vmul.f32 %v1054, 0.6931472
    %v1056 = vsub.f32 %v1008, %v1045
    %v1057 = vsub.f32 %v1009, %v1047
    %v1058 = vsub.f32 %v1010, %v1049
    %v1059 = vsub.f32 %v1011, %v1051
    %v1060 = vsub.f32 %v1012, %v1053
    %v1061 = vsub.f32 %v1013, %v1055
    %1062 = vst.msk [vmem:[%s9] sm:$0xff] %vm187, %v1056
    %1063 = vst.msk [vmem:[%s9 + $0x8] sm:$0xff] %vm187, %v1057
    %1064 = vst.msk [vmem:[%s9 + $0x10] sm:$0xff] %vm187, %v1058
    %1065 = vst.msk [vmem:[%s9 + $0x18] sm:$0xff] %vm187, %v1059
    %1066 = vst.msk [vmem:[%s9 + $0x20] sm:$0xff] %vm187, %v1060
    %1067 = vst.msk [vmem:[%s9 + $0x28] sm:$0xff] %vm187, %v1061
    // Predicated region
    $region58: #{tpu_custom_call.1} parent=1 // pred_check
      _
    $region59: #{tpu_custom_call.1} parent=1 // pred_check_branch
      %1069 = sbr.rel (0) target = $region61
    $region60: #{tpu_custom_call.1} parent=1 // pred_region
      _
    $region61: #{tpu_custom_call.1} parent=1 // pred_fallthru
      _
    // Predicated region
    $region62: #{tpu_custom_call.1} parent=1 // pred_check
      _
    $region63: #{tpu_custom_call.1} parent=1 // pred_check_branch
      %1071 = sbr.rel (0) target = $region65
    $region64: #{tpu_custom_call.1} parent=1 // pred_region
      _
    $region65: #{tpu_custom_call.1} parent=1 // pred_fallthru
      _
    %1072 = vsyncpa [#allocation4], 1
    %1073 = vsyncpa [#allocation6], 1
    %1074 = vsyncpa [#allocation9], 1

</llo_original>
